<compile_context>
chip_gen: v6e
topology: v6e:2x2x1
jax: 0.10.0
libtpu: 0.0.40
codegen_flags: <defaults>
</compile_context>

<pallas_src>
import functools
import math

import jax
import jax.numpy as jnp
from jax.experimental import pallas as pl
from jax.experimental.pallas import tpu as pltpu

LANE = 128


def _round_up(x, m):
    return ((x + m - 1) // m) * m


def _pad2(x, shape):
    return jnp.pad(x, [(0, s - d) for d, s in zip(x.shape, shape)])


# ----------------------------- kernels -----------------------------

def transform_kernel(h_ref, w_ref, y_ref):
    """Y = H @ W (per node row-block); downcast to bf16 for the MXU aggregation."""
    y = jnp.dot(h_ref[...], w_ref[...], preferred_element_type=jnp.float32)
    y_ref[...] = y.astype(y_ref.dtype)


def aggregate_kernel(a_ref, y_ref, b_ref, out_ref, acc_ref, *, relu):
    """out[i] = act( sum_k A[i,k] @ Y[k] + b ), f32 VMEM accumulator over the k axis."""
    k = pl.program_id(1)

    @pl.when(k == 0)
    def _():
        acc_ref[...] = jnp.zeros_like(acc_ref)

    acc_ref[...] += jnp.dot(a_ref[...], y_ref[...],
                            preferred_element_type=jnp.float32)

    @pl.when(k == pl.num_programs(1) - 1)
    def _():
        h = acc_ref[...] + b_ref[...]
        if relu:
            h = jnp.maximum(h, 0.0)
        out_ref[...] = h


def pool_classify_kernel(p_ref, h_ref, wc_ref, bc_ref, emb_ref, logits_ref, acc_ref):
    """emb = P @ H (scatter_mean as dense matmul over node blocks); logits = emb @ Wc + bc."""
    k = pl.program_id(0)

    @pl.when(k == 0)
    def _():
        acc_ref[...] = jnp.zeros_like(acc_ref)

    acc_ref[...] += jnp.dot(p_ref[...], h_ref[...],
                            preferred_element_type=jnp.float32)

    @pl.when(k == pl.num_programs(0) - 1)
    def _():
        emb = acc_ref[...]
        emb_ref[...] = emb
        logits_ref[...] = (jnp.dot(emb, wc_ref[...],
                                   preferred_element_type=jnp.float32)
                           + bc_ref[...])


# ------------------------- pallas_call wrappers -------------------------

def _feature_transform(h, w, tm):
    n_pad, fin = h.shape
    fout = w.shape[1]
    return pl.pallas_call(
        transform_kernel,
        out_shape=jax.ShapeDtypeStruct((n_pad, fout), jnp.bfloat16),
        grid_spec=pltpu.PrefetchScalarGridSpec(
            num_scalar_prefetch=0,
            grid=(n_pad // tm,),
            in_specs=[pl.BlockSpec((tm, fin), lambda i: (i, 0)),
                      pl.BlockSpec((fin, fout), lambda i: (0, 0))],
            out_specs=pl.BlockSpec((tm, fout), lambda i: (i, 0)),
        ),
        compiler_params=pltpu.CompilerParams(
            dimension_semantics=("parallel",)),
    )(h, w)


def _aggregate(a_bf, y_bf, b, *, relu, tm, tk):
    n_pad = a_bf.shape[0]
    fout = y_bf.shape[1]
    return pl.pallas_call(
        functools.partial(aggregate_kernel, relu=relu),
        out_shape=jax.ShapeDtypeStruct((n_pad, fout), jnp.float32),
        grid_spec=pltpu.PrefetchScalarGridSpec(
            num_scalar_prefetch=0,
            grid=(n_pad // tm, n_pad // tk),
            in_specs=[pl.BlockSpec((tm, tk), lambda i, k: (i, k)),      # A_hat tile (bf16)
                      pl.BlockSpec((tk, fout), lambda i, k: (k, 0)),    # Y tile (bf16)
                      pl.BlockSpec((1, fout), lambda i, k: (0, 0))],    # bias (f32)
            out_specs=pl.BlockSpec((tm, fout), lambda i, k: (i, 0)),
            scratch_shapes=[pltpu.VMEM((tm, fout), jnp.float32)],
        ),
        compiler_params=pltpu.CompilerParams(
            dimension_semantics=("parallel", "arbitrary"),
            vmem_limit_bytes=32 * 1024 * 1024),
    )(a_bf, y_bf, b)


def _pool_classify(p, h, wc, bc, *, tk):
    g_pad, n_pad = p.shape
    e_pad = h.shape[1]
    c_pad = wc.shape[1]
    return pl.pallas_call(
        pool_classify_kernel,
        out_shape=(jax.ShapeDtypeStruct((g_pad, e_pad), jnp.float32),
                   jax.ShapeDtypeStruct((g_pad, c_pad), jnp.float32)),
        grid_spec=pltpu.PrefetchScalarGridSpec(
            num_scalar_prefetch=0,
            grid=(n_pad // tk,),
            in_specs=[pl.BlockSpec((g_pad, tk), lambda k: (0, k)),
                      pl.BlockSpec((tk, e_pad), lambda k: (k, 0)),
                      pl.BlockSpec((e_pad, c_pad), lambda k: (0, 0)),
                      pl.BlockSpec((1, c_pad), lambda k: (0, 0))],
            out_specs=(pl.BlockSpec((g_pad, e_pad), lambda k: (0, 0)),
                       pl.BlockSpec((g_pad, c_pad), lambda k: (0, 0))),
            scratch_shapes=[pltpu.VMEM((g_pad, e_pad), jnp.float32)],
        ),
        compiler_params=pltpu.CompilerParams(
            dimension_semantics=("arbitrary",)),
    )(p, h, wc, bc)


def gcn_forward(a_hat, pool_mat, x, params, *, tm=256, tk=256):
    """GCN forward.  a_hat: (N,N) normalized adjacency, pool_mat: (G,N), x: (N,F)."""
    (w1, b1, w2, b2, w3, b3, wc, bc) = params
    n = x.shape[0]
    g = pool_mat.shape[0]
    hidden = w1.shape[1]
    emb_dim = w3.shape[1]
    n_classes = wc.shape[1]

    # pad to lane/sublane-dense, tile-divisible sizes
    n_pad = _round_up(n, math.lcm(tm, tk))
    f_pad = _round_up(x.shape[1], LANE)
    h_pad = _round_up(hidden, LANE)
    e_pad = _round_up(emb_dim, LANE)
    c_pad = _round_up(n_classes, LANE)
    g_pad = _round_up(g, 8)

    a_p = _pad2(a_hat, (n_pad, n_pad)).astype(jnp.bfloat16)   # dominant operand -> bf16
    p_p = _pad2(pool_mat, (g_pad, n_pad)).astype(jnp.float32)
    x_p = _pad2(x, (n_pad, f_pad)).astype(jnp.float32)

    w1_p = _pad2(w1, (f_pad, h_pad)); b1_p = _pad2(b1, (1, h_pad))
    w2_p = _pad2(w2, (h_pad, h_pad)); b2_p = _pad2(b2, (1, h_pad))
    w3_p = _pad2(w3, (h_pad, e_pad)); b3_p = _pad2(b3, (1, e_pad))
    wc_p = _pad2(wc, (e_pad, c_pad)); bc_p = _pad2(bc, (1, c_pad))

    # conv1 + ReLU   (dropout = identity at inference)
    h = _aggregate(a_p, _feature_transform(x_p, w1_p, tm), b1_p, relu=True, tm=tm, tk=tk)
    # conv2 + ReLU
    h = _aggregate(a_p, _feature_transform(h, w2_p, tm), b2_p, relu=True, tm=tm, tk=tk)
    # conv3 (no ReLU)
    h = _aggregate(a_p, _feature_transform(h, w3_p, tm), b3_p, relu=False, tm=tm, tk=tk)
    # scatter_mean pool + classifier
    emb_p, logits_p = _pool_classify(p_p, h, wc_p, bc_p, tk=tk)

    return emb_p[:g, :emb_dim], logits_p[:g, :n_classes]


# ----------------- plain-JAX glue: graph preprocessing -----------------

def build_norm_adj(edge_index, num_nodes):
    """Dense D^{-1/2}(A + I)D^{-1/2} from edge_index (2, E) [src; dst]."""
    src, dst = edge_index[0], edge_index[1]
    adj = jnp.zeros((num_nodes, num_nodes), jnp.float32)
    adj = adj.at[dst, src].set(1.0)             # messages flow src -> dst (row = target)
    adj = adj + jnp.eye(num_nodes, dtype=jnp.float32)
    deg = adj.sum(axis=1)
    dinv = jnp.where(deg > 0, 1.0 / jnp.sqrt(deg), 0.0)
    return adj * dinv[:, None] * dinv[None, :]


def build_pool_matrix(batch, num_graphs):
    """P (G, N): P @ X == scatter_mean(X, batch, dim=0)."""
    onehot = (batch[None, :] == jnp.arange(num_graphs)[:, None]).astype(jnp.float32)
    counts = onehot.sum(axis=1, keepdims=True)
    return onehot / jnp.maximum(counts, 1.0)


if __name__ == "__main__":
    # synthetic batch: 24 ring graphs x 8 nodes = 192 nodes; tm=tk=128 -> N_pad=256,
    # so the aggregation kernel runs a real (2 parallel x 2 reduction) grid.
    nodes_per_graph = 8
    num_graphs = 24
    num_nodes = num_graphs * nodes_per_graph
    input_dim = 8
    hidden_dim = 32
    embedding_dim = 16

    key = jax.random.PRNGKey(0)
    k_x, k1, k2, k3, kc, kcb = jax.random.split(key, 6)

    x = jax.random.normal(k_x, (num_nodes, input_dim), dtype=jnp.float32)

    # undirected ring edges within each graph
    src_list, dst_list = [], []
    for gi in range(num_graphs):
        base = gi * nodes_per_graph
        for i in range(nodes_per_graph):
            u, v = base + i, base + (i + 1) % nodes_per_graph
            src_list += [u, v]
            dst_list += [v, u]
    edge_index = jnp.array([src_list, dst_list], dtype=jnp.int32)
    batch = jnp.repeat(jnp.arange(num_graphs, dtype=jnp.int32), nodes_per_graph)

    a_hat = build_norm_adj(edge_index, num_nodes)
    pool_mat = build_pool_matrix(batch, num_graphs)

    # deterministic parameter init (glorot-ish scaled normals, zero conv biases)
    def init_w(k, fan_in, fan_out):
        return (jax.random.normal(k, (fan_in, fan_out), dtype=jnp.float32)
                * jnp.sqrt(2.0 / (fan_in + fan_out)))

    w1 = init_w(k1, input_dim, hidden_dim);       b1 = jnp.zeros((1, hidden_dim), jnp.float32)
    w2 = init_w(k2, hidden_dim, hidden_dim);      b2 = jnp.zeros((1, hidden_dim), jnp.float32)
    w3 = init_w(k3, hidden_dim, embedding_dim);   b3 = jnp.zeros((1, embedding_dim), jnp.float32)
    wc = init_w(kc, embedding_dim, 2)
    bc = jax.random.normal(kcb, (1, 2), dtype=jnp.float32) * 0.01

    params = (w1, b1, w2, b2, w3, b3, wc, bc)

    embedding, logits = gcn_forward(a_hat, pool_mat, x, params, tm=128, tk=128)
    jax.block_until_ready((embedding, logits))

    # reference in plain JAX, mirroring the kernel's bf16 casts of A_hat / X@W
    a_bf = a_hat.astype(jnp.bfloat16).astype(jnp.float32)

    def ref_forward():
        def layer(h, w, b, relu):
            y = (h @ w).astype(jnp.bfloat16).astype(jnp.float32)
            out = a_bf @ y + b
            return jnp.maximum(out, 0.0) if relu else out
        h = layer(x, w1, b1, True)
        h = layer(h, w2, b2, True)
        h = layer(h, w3, b3, False)
        emb = pool_mat @ h
        return emb, emb @ wc + bc

    emb_expect, logits_expect = ref_forward()
    assert embedding.shape == (num_graphs, embedding_dim)
    assert logits.shape == (num_graphs, 2)
    assert jnp.allclose(embedding, emb_expect, atol=2e-2, rtol=2e-2), \
        float(jnp.max(jnp.abs(embedding - emb_expect)))
    assert jnp.allclose(logits, logits_expect, atol=2e-2, rtol=2e-2), \
        float(jnp.max(jnp.abs(logits - logits_expect)))

    print("KERNEL_OK")
</pallas_src>

<mosaic_0001>
module attributes {stable_mosaic.version = 11 : i64} {
  func.func @transform_kernel(%arg0: i32, %arg1: memref<128x128xf32, #tpu.memory_space<vmem>>, %arg2: memref<128x128xf32, #tpu.memory_space<vmem>>, %arg3: memref<128x128xbf16, #tpu.memory_space<vmem>>) attributes {dimension_semantics = [#tpu.dimension_semantics<parallel>], iteration_bounds = array<i64: 2>, scalar_prefetch = 0 : i64, scratch_operands = 0 : i64, tpu.core_type = #tpu.core_type<tc>, window_params = [{transform_indices = @transform_0, window_bounds = array<i64: 128, 128>}, {pipeline_mode = #tpu.pipeline_mode<synchronous>, transform_indices = @transform_1, window_bounds = array<i64: 128, 128>}, {transform_indices = @transform_2, window_bounds = array<i64: 128, 128>}]} {
    %c0 = arith.constant 0 : index
    %c0_0 = arith.constant 0 : index
    %0 = vector.load %arg1[%c0, %c0_0] : memref<128x128xf32, #tpu.memory_space<vmem>>, vector<128x128xf32>
    %c0_1 = arith.constant 0 : index
    %c0_2 = arith.constant 0 : index
    %1 = vector.load %arg2[%c0_1, %c0_2] : memref<128x128xf32, #tpu.memory_space<vmem>>, vector<128x128xf32>
    %cst = arith.constant dense<0.000000e+00> : vector<128x128xf32>
    %2 = tpu.matmul %0, %1, %cst {dimension_numbers = #tpu.dot_dimension_numbers<[1], [0], [0], [1], [0, 0, 1, 1], [], []>} : vector<128x128xf32>, vector<128x128xf32>, vector<128x128xf32> -> vector<128x128xf32>
    %3 = arith.truncf %2 : vector<128x128xf32> to vector<128x128xbf16>
    %c0_3 = arith.constant 0 : index
    %c0_4 = arith.constant 0 : index
    %4 = vector.load %arg3[%c0_3, %c0_4] : memref<128x128xbf16, #tpu.memory_space<vmem>>, vector<128x128xbf16>
    tpu.vector_store %arg3[%c0_3, %c0_4], %3 {strides = array<i32>} : memref<128x128xbf16, #tpu.memory_space<vmem>>, vector<128x128xbf16>,
    return
  }
  func.func @transform_0(%arg0: i32) -> (i32, i32) {
    %c0_i32 = arith.constant 0 : i32
    %c0_i32_0 = arith.constant 0 : i32
    return %arg0, %c0_i32 : i32, i32
  }
  func.func @transform_1(%arg0: i32) -> (i32, i32) {
    %c0_i32 = arith.constant 0 : i32
    %c0_i32_0 = arith.constant 0 : i32
    %c0_i32_1 = arith.constant 0 : i32
    return %c0_i32, %c0_i32_0 : i32, i32
  }
  func.func @transform_2(%arg0: i32) -> (i32, i32) {
    %c0_i32 = arith.constant 0 : i32
    %c0_i32_0 = arith.constant 0 : i32
    return %arg0, %c0_i32 : i32, i32
  }
}

</mosaic_0001>

<llo_original>
// kernel: tpu_custom_call.1
$region0: #{tpu_custom_call.1}
  #allocation0 [shape = 'u32[]', space=smem, size = 0x4, offset = 0x4, fixed_abs, tag = 'smem constant byte address 0x4 - core index']
  #allocation1 [shape = 'u32[144,128]{1,0:T(1,128)}', space=vmem, size = 0x12000, scoped, tag = 'internal scratch']
  %s0 = inlined_call_operand.hbm [shape: f32[256,128], index: 0, kind: input, shape index: {}]
  %s1 = inlined_call_operand.hbm [shape: f32[128,128], index: 1, kind: input, shape index: {}]
  %s2 = inlined_call_operand.hbm [shape: bf16[256,128], index: 2, kind: output, shape index: {}]
  %s3 = sld [smem:[#allocation0]]
  $region49: #{tpu_custom_call.1} parent=0
    _
  %s5 = ssub.s32 1, %s3
  %s6 = scalar_select 0, %s5, %s3
  $region1: #{tpu_custom_call.1} parent=0
    #allocation2 [shape = 'u8[131072]{0}', space=vmem, size = 0x20000, scoped, tag = 'input window, operand 0']
    #allocation3 [shape = 's32[2]{0}', space=sflag, size = 0x8, scoped, tag = 'scoped memory for tpu_custom_call.1']
    #allocation4 [shape = 's32[2]{0}', space=sflag, size = 0x8, scoped, tag = 'scoped memory for tpu_custom_call.1']
    #allocation5 [shape = 'u8[65536]{0}', space=vmem, size = 0x10000, scoped, tag = 'input window, operand 1, single buffered']
    #allocation6 [shape = 's32[1]{0}', space=sflag, size = 0x4, scoped, tag = 'scoped memory for tpu_custom_call.1']
    #allocation7 [shape = 'u8[65536]{0}', space=vmem, size = 0x10000, scoped, tag = 'output window, operand 0']
    %7 = vsyncpa [#allocation3], 0
    %s8 = scalar_lea.sflag [#allocation3], 1
    %9 = vsyncpa %s8, 0
    %10 = vsyncpa [#allocation6], 0
    %11 = vsyncpa [#allocation4], 0
    %s12 = scalar_lea.sflag [#allocation4], 1
    %13 = vsyncpa %s12, 0
    loop: start=0, step=1, limit=4
    $region2: #{tpu_custom_call.1} parent=1 // loop_pre_header
      _
    $region3: #{tpu_custom_call.1} parent=1 // loop_header
      %s15 = sphi 0, %s19
      %p16 = scmp.ge.s32.totalorder %s15, 4
      %s25 = sphi 0, %s27
      %s28 = sphi 0, %s25
      %s29 = sphi 0, %s28
      %s45 = sphi 0, %s29
      %s49 = sphi 0, %s49
      %s51 = sphi 0, %s49
      %s52 = sphi 0, %s51
      %s66 = sphi 0, %s52
      %s72 = sphi 0, %s74
      %s75 = sphi 0, %s72
      %s76 = sphi 0, %s75
      %s92 = sphi 0, %s76
    $region4: #{tpu_custom_call.1} parent=1 // loop_header_branch
      %18 = sbr.rel (%p16) target = $region8
    $region5: #{tpu_custom_call.1} parent=1 // loop_body
      %s20 = ssub.s32 %s15, 1
      %s21 = ssub.s32 %s15, 2
      %s22 = sadd.s32 %s15, 1
      %s23 = ssub.s32 %s15, %s22
      %p24 = scmp.eq.s32.totalorder %s23, 0
      %s26 = sadd.s32 %s25, 1
      %s27 = scalar_select %p24, %s25, %s26
      %p30 = pneg %p24
      %p31 = scmp.eq.s32.totalorder %s15, 1
      %p32 = por %p30, %p31
      %p33 = scmp.ne.s32.totalorder %s25, %s28
      %p34 = scmp.eq.s32.totalorder %s15, 0
      %p35 = por %p33, %p34
      %p36 = scmp.ne.s32.totalorder %s25, %s28
      %p37 = scmp.eq.s32.totalorder %s20, 1
      %p38 = por %p36, %p37
      %p39 = scmp.ne.s32.totalorder %s28, %s29
      %p40 = scmp.eq.s32.totalorder %s20, 0
      %p41 = por %p39, %p40
      %p42 = scmp.ne.s32.totalorder %s28, %s29
      %p43 = scmp.eq.s32.totalorder %s21, 1
      %p44 = por %p42, %p43
      %p46 = scmp.ne.s32.totalorder %s29, %s45
      %p47 = scmp.eq.s32.totalorder %s21, 0
      %p48 = por %p46, %p47
      %s50 = sadd.s32 %s49, 1
      %p53 = scmp.eq.s32.totalorder %s15, 1
      %p54 = scmp.ne.s32.totalorder %s49, %s51
      %p55 = scmp.eq.s32.totalorder %s15, 0
      %p56 = por %p54, %p55
      %p57 = scmp.ne.s32.totalorder %s49, %s51
      %p58 = scmp.eq.s32.totalorder %s20, 1
      %p59 = por %p57, %p58
      %p60 = scmp.ne.s32.totalorder %s51, %s52
      %p61 = scmp.eq.s32.totalorder %s20, 0
      %p62 = por %p60, %p61
      %p63 = scmp.ne.s32.totalorder %s51, %s52
      %p64 = scmp.eq.s32.totalorder %s21, 1
      %p65 = por %p63, %p64
      %p67 = scmp.ne.s32.totalorder %s52, %s66
      %p68 = scmp.eq.s32.totalorder %s21, 0
      %p69 = por %p67, %p68
      %s70 = ssub.s32 %s15, %s22
      %p71 = scmp.eq.s32.totalorder %s70, 0
      %s73 = sadd.s32 %s72, 1
      %s74 = scalar_select %p71, %s72, %s73
      %p77 = pneg %p71
      %p78 = scmp.eq.s32.totalorder %s15, 1
      %p79 = por %p77, %p78
      %p80 = scmp.ne.s32.totalorder %s72, %s75
      %p81 = scmp.eq.s32.totalorder %s15, 0
      %p82 = por %p80, %p81
      %p83 = scmp.ne.s32.totalorder %s72, %s75
      %p84 = scmp.eq.s32.totalorder %s20, 1
      %p85 = por %p83, %p84
      %p86 = scmp.ne.s32.totalorder %s75, %s76
      %p87 = scmp.eq.s32.totalorder %s20, 0
      %p88 = por %p86, %p87
      %p89 = scmp.ne.s32.totalorder %s75, %s76
      %p90 = scmp.eq.s32.totalorder %s21, 1
      %p91 = por %p89, %p90
      %p93 = scmp.ne.s32.totalorder %s76, %s92
      %p94 = scmp.eq.s32.totalorder %s21, 0
      %p95 = por %p93, %p94
      %p96 = scmp.le.s32.totalorder 1, %s15
      %p97 = scmp.lt.s32.totalorder %s15, 3
      %p98 = pnand %p96, %p97
      %p99 = pneg %p98
      // Predicated region
      $region9: #{tpu_custom_call.1} parent=5 // pred_check
        _
      $region10: #{tpu_custom_call.1} parent=5 // pred_check_branch
        %101 = sbr.rel (%p98) target = $region12
      $region11: #{tpu_custom_call.1} parent=5 // pred_region
        %s102 = ssub.s32 %s15, 1
        // Predicated region
        $region13: #{tpu_custom_call.1} parent=11 // pred_check
          %p103 = pneg %p62
        $region14: #{tpu_custom_call.1} parent=11 // pred_check_branch
          %105 = sbr.rel (%p103) target = $region16
        $region15: #{tpu_custom_call.1} parent=11 // pred_region
          %s107 = ssub.s32 2048, 2048
          %108 = vsyncadd [#allocation6], %s107
          %s109 = sshll.u32 [#allocation5], 4
          %s110 = int_to_ptr.vmem [resolvable:$true] %s109
          %115 = dma.hbm_to_vmem [thread:$0]  %s1, 2048, %s110, [#allocation6], 128, 128, 8
        $region16: #{tpu_custom_call.1} parent=11 // pred_fallthru
          _
      $region12: #{tpu_custom_call.1} parent=5 // pred_fallthru
        _
      %p116 = scmp.lt.s32.totalorder %s15, 2
      // Predicated region
      $region17: #{tpu_custom_call.1} parent=5 // pred_check
        %p117 = pneg %p116
      $region18: #{tpu_custom_call.1} parent=5 // pred_check_branch
        %119 = sbr.rel (%p117) target = $region20
      $region19: #{tpu_custom_call.1} parent=5 // pred_region
        // Predicated region
        $region21: #{tpu_custom_call.1} parent=19 // pred_check
          %p120 = pneg %p35
        $region22: #{tpu_custom_call.1} parent=19 // pred_check_branch
          %122 = sbr.rel (%p120) target = $region24
        $region23: #{tpu_custom_call.1} parent=19 // pred_region
          %s123 = sand.u32 %s25, 1
          %s124 = scalar_lea.sflag [#allocation3], %s123
          %s125 = sand.u32 %s25, 1
          %s126 = smul.addr %s125, 128
          %s127 = scalar_lea.vmem [#allocation2], %s126
          %s128 = smul.u32 16, %s15
          %s130 = ssub.s32 2048, 2048
          %131 = vsyncadd %s124, %s130
          %s132 = smul.addr %s128, 128
          %s133 = scalar_lea.hbm %s0, %s132
          %s134 = sshll.u32 %s127, 4
          %s135 = int_to_ptr.vmem [resolvable:$true] %s134
          %140 = dma.hbm_to_vmem [thread:$0]  %s133, 2048, %s135, %s124, 128, 128, 8
        $region24: #{tpu_custom_call.1} parent=19 // pred_fallthru
          _
      $region20: #{tpu_custom_call.1} parent=5 // pred_fallthru
        _
      %p141 = scmp.le.s32.totalorder 1, %s15
      %p142 = scmp.lt.s32.totalorder %s15, 3
      %p143 = pnand %p141, %p142
      %p144 = pneg %p143
      // Predicated region
      $region25: #{tpu_custom_call.1} parent=5 // pred_check
        _
      $region26: #{tpu_custom_call.1} parent=5 // pred_check_branch
        %146 = sbr.rel (%p143) target = $region28
      $region27: #{tpu_custom_call.1} parent=5 // pred_region
        %s147 = ssub.s32 %s15, 1
        %s148 = sand.u32 %s28, 1
        %s149 = scalar_lea.sflag [#allocation3], %s148
        %s150 = sand.u32 %s28, 1
        %s151 = smul.addr %s150, 128
        %s152 = scalar_lea.vmem [#allocation2], %s151
        // Predicated region
        $region29: #{tpu_custom_call.1} parent=27 // pred_check
          %p153 = pneg %p41
        $region30: #{tpu_custom_call.1} parent=27 // pred_check_branch
          %155 = sbr.rel (%p153) target = $region32
        $region31: #{tpu_custom_call.1} parent=27 // pred_region
          %156 = dma.done %s149, 2048
        $region32: #{tpu_custom_call.1} parent=27 // pred_fallthru
          _
        // Predicated region
        $region33: #{tpu_custom_call.1} parent=27 // pred_check
          %p157 = pneg %p62
        $region34: #{tpu_custom_call.1} parent=27 // pred_check_branch
          %159 = sbr.rel (%p157) target = $region36
        $region35: #{tpu_custom_call.1} parent=27 // pred_region
          %160 = dma.done [#allocation6], 2048
        $region36: #{tpu_custom_call.1} parent=27 // pred_fallthru
          _
        %s161 = sand.u32 %s28, 1
        %s162 = scalar_lea.sflag [#allocation3], %s161
        %s163 = sand.u32 %s28, 1
        %s164 = smul.addr %s163, 128
        %s165 = scalar_lea.vmem [#allocation2], %s164
        %p166 = pneg %p41
        %p167 = pneg %p38
        %p168 = pneg %p62
        %p169 = pneg %p59
        %p170 = pneg %p88
        %p171 = pneg %p85
        %s172 = sand.u32 %s75, 1
        %s173 = scalar_lea.sflag [#allocation4], %s172
        %s174 = sand.u32 %s75, 1
        %s175 = smul.addr %s174, 64
        %s176 = scalar_lea.vmem [#allocation7], %s175
        %s177 = smul.u32 16, %s20
        %s178 = smul.u32 16, %s20
        %v179 = vld [vmem:[%s152] sm:$0xff]
        %v180 = vld [vmem:[%s152 + $0x8] sm:$0xff]
        %v181 = vld [vmem:[%s152 + $0x10] sm:$0xff]
        %v182 = vld [vmem:[%s152 + $0x18] sm:$0xff]
        %v183 = vld [vmem:[%s152 + $0x20] sm:$0xff]
        %v184 = vld [vmem:[%s152 + $0x28] sm:$0xff]
        %v185 = vld [vmem:[%s152 + $0x30] sm:$0xff]
        %v186 = vld [vmem:[%s152 + $0x38] sm:$0xff]
        %v187 = vld [vmem:[%s152 + $0x40] sm:$0xff]
        %v188 = vld [vmem:[%s152 + $0x48] sm:$0xff]
        %v189 = vld [vmem:[%s152 + $0x50] sm:$0xff]
        %v190 = vld [vmem:[%s152 + $0x58] sm:$0xff]
        %v191 = vld [vmem:[%s152 + $0x60] sm:$0xff]
        %v192 = vld [vmem:[%s152 + $0x68] sm:$0xff]
        %v193 = vld [vmem:[%s152 + $0x70] sm:$0xff]
        %v194 = vld [vmem:[%s152 + $0x78] sm:$0xff]
        %v195 = vld [vmem:[#allocation5] sm:$0xff]
        %v196 = vld [vmem:[#allocation5 + $0x8] sm:$0xff]
        %v197 = vld [vmem:[#allocation5 + $0x10] sm:$0xff]
        %v198 = vld [vmem:[#allocation5 + $0x18] sm:$0xff]
        %v199 = vld [vmem:[#allocation5 + $0x20] sm:$0xff]
        %v200 = vld [vmem:[#allocation5 + $0x28] sm:$0xff]
        %v201 = vld [vmem:[#allocation5 + $0x30] sm:$0xff]
        %v202 = vld [vmem:[#allocation5 + $0x38] sm:$0xff]
        %v203 = vld [vmem:[#allocation5 + $0x40] sm:$0xff]
        %v204 = vld [vmem:[#allocation5 + $0x48] sm:$0xff]
        %v205 = vld [vmem:[#allocation5 + $0x50] sm:$0xff]
        %v206 = vld [vmem:[#allocation5 + $0x58] sm:$0xff]
        %v207 = vld [vmem:[#allocation5 + $0x60] sm:$0xff]
        %v208 = vld [vmem:[#allocation5 + $0x68] sm:$0xff]
        %v209 = vld [vmem:[#allocation5 + $0x70] sm:$0xff]
        %v210 = vld [vmem:[#allocation5 + $0x78] sm:$0xff]
        %211 = vmatprep.subr.mxu0 0.0
        %212 = vmatpush1.msra.mxu0 %v210
        %213 = vmatprep.subr.mxu0 0.0
        %214 = vmatpush1.msra.mxu0 %v209
        %215 = vmatprep.subr.mxu0 0.0
        %216 = vmatpush1.msra.mxu0 %v208
        %217 = vmatprep.subr.mxu0 0.0
        %218 = vmatpush1.msra.mxu0 %v207
        %219 = vmatprep.subr.mxu0 0.0
        %220 = vmatpush1.msra.mxu0 %v206
        %221 = vmatprep.subr.mxu0 0.0
        %222 = vmatpush1.msra.mxu0 %v205
        %223 = vmatprep.subr.mxu0 0.0
        %224 = vmatpush1.msra.mxu0 %v204
        %225 = vmatprep.subr.mxu0 0.0
        %226 = vmatpush1.msra.mxu0 %v203
        %227 = vmatprep.subr.mxu0 0.0
        %228 = vmatpush1.msra.mxu0 %v202
        %229 = vmatprep.subr.mxu0 0.0
        %230 = vmatpush1.msra.mxu0 %v201
        %231 = vmatprep.subr.mxu0 0.0
        %232 = vmatpush1.msra.mxu0 %v200
        %233 = vmatprep.subr.mxu0 0.0
        %234 = vmatpush1.msra.mxu0 %v199
        %235 = vmatprep.subr.mxu0 0.0
        %236 = vmatpush1.msra.mxu0 %v198
        %237 = vmatprep.subr.mxu0 0.0
        %238 = vmatpush1.msra.mxu0 %v197
        %239 = vmatprep.subr.mxu0 0.0
        %240 = vmatpush1.msra.mxu0 %v196
        %241 = vmatprep.subr.mxu0 0.0
        %242 = vmatpush1.msra.mxu0 %v195
        %243 = vmatprep.subr.mxu0 0.0
        %244 = vmatpush2.msra.mxu0 0.0
        %245 = vmatprep.subr.mxu0 0.0
        %246 = vmatpush2.msra.mxu0 0.0
        %247 = vmatprep.subr.mxu0 0.0
        %248 = vmatpush2.msra.mxu0 0.0
        %249 = vmatprep.subr.mxu0 0.0
        %250 = vmatpush2.msra.mxu0 0.0
        %251 = vmatprep.subr.mxu0 0.0
        %252 = vmatpush2.msra.mxu0 0.0
        %253 = vmatprep.subr.mxu0 0.0
        %254 = vmatpush2.msra.mxu0 0.0
        %255 = vmatprep.subr.mxu0 0.0
        %256 = vmatpush2.msra.mxu0 0.0
        %257 = vmatprep.subr.mxu0 0.0
        %258 = vmatpush2.msra.mxu0 0.0
        %259 = vmatprep.subr.mxu0 0.0
        %260 = vmatpush2.msra.mxu0 0.0
        %261 = vmatprep.subr.mxu0 0.0
        %262 = vmatpush2.msra.mxu0 0.0
        %263 = vmatprep.subr.mxu0 0.0
        %264 = vmatpush2.msra.mxu0 0.0
        %265 = vmatprep.subr.mxu0 0.0
        %266 = vmatpush2.msra.mxu0 0.0
        %267 = vmatprep.subr.mxu0 0.0
        %268 = vmatpush2.msra.mxu0 0.0
        %269 = vmatprep.subr.mxu0 0.0
        %270 = vmatpush2.msra.mxu0 0.0
        %271 = vmatprep.subr.mxu0 0.0
        %272 = vmatpush2.msra.mxu0 0.0
        %273 = vmatprep.subr.mxu0 0.0
        %274 = vmatpush2.msra.mxu0 0.0
        %275 = vmatprep.mubr.f32.mxu0 0.0
        %276 = vmatmul.mubr.f32.gmra.mxu0 %v179
        %v277 = vpop.f32.mrf.mxu0
        %v278 = vadd.f32 0.0, %v277
        %v279 = vpop.f32.mrf.mxu0
        %280 = vmatprep.mubr.f32.mxu0 0.0
        %281 = vmatmul.mubr.f32.gmra.mxu0 %v180
        %v282 = vpop.f32.mrf.mxu0
        %v283 = vadd.f32 0.0, %v282
        %v284 = vpop.f32.mrf.mxu0
        %285 = vmatprep.mubr.f32.mxu0 0.0
        %286 = vmatmul.mubr.f32.gmra.mxu0 %v181
        %v287 = vpop.f32.mrf.mxu0
        %v288 = vadd.f32 0.0, %v287
        %v289 = vpop.f32.mrf.mxu0
        %290 = vmatprep.mubr.f32.mxu0 0.0
        %291 = vmatmul.mubr.f32.gmra.mxu0 %v182
        %v292 = vpop.f32.mrf.mxu0
        %v293 = vadd.f32 0.0, %v292
        %v294 = vpop.f32.mrf.mxu0
        %295 = vmatprep.mubr.f32.mxu0 0.0
        %296 = vmatmul.mubr.f32.gmra.mxu0 %v183
        %v297 = vpop.f32.mrf.mxu0
        %v298 = vadd.f32 0.0, %v297
        %v299 = vpop.f32.mrf.mxu0
        %300 = vmatprep.mubr.f32.mxu0 0.0
        %301 = vmatmul.mubr.f32.gmra.mxu0 %v184
        %v302 = vpop.f32.mrf.mxu0
        %v303 = vadd.f32 0.0, %v302
        %v304 = vpop.f32.mrf.mxu0
        %305 = vmatprep.mubr.f32.mxu0 0.0
        %306 = vmatmul.mubr.f32.gmra.mxu0 %v185
        %v307 = vpop.f32.mrf.mxu0
        %v308 = vadd.f32 0.0, %v307
        %v309 = vpop.f32.mrf.mxu0
        %310 = vmatprep.mubr.f32.mxu0 0.0
        %311 = vmatmul.mubr.f32.gmra.mxu0 %v186
        %v312 = vpop.f32.mrf.mxu0
        %v313 = vadd.f32 0.0, %v312
        %v314 = vpop.f32.mrf.mxu0
        %315 = vmatprep.mubr.f32.mxu0 0.0
        %316 = vmatmul.mubr.f32.gmra.mxu0 %v187
        %v317 = vpop.f32.mrf.mxu0
        %v318 = vadd.f32 0.0, %v317
        %v319 = vpop.f32.mrf.mxu0
        %320 = vmatprep.mubr.f32.mxu0 0.0
        %321 = vmatmul.mubr.f32.gmra.mxu0 %v188
        %v322 = vpop.f32.mrf.mxu0
        %v323 = vadd.f32 0.0, %v322
        %v324 = vpop.f32.mrf.mxu0
        %325 = vmatprep.mubr.f32.mxu0 0.0
        %326 = vmatmul.mubr.f32.gmra.mxu0 %v189
        %v327 = vpop.f32.mrf.mxu0
        %v328 = vadd.f32 0.0, %v327
        %v329 = vpop.f32.mrf.mxu0
        %330 = vmatprep.mubr.f32.mxu0 0.0
        %331 = vmatmul.mubr.f32.gmra.mxu0 %v190
        %v332 = vpop.f32.mrf.mxu0
        %v333 = vadd.f32 0.0, %v332
        %v334 = vpop.f32.mrf.mxu0
        %335 = vmatprep.mubr.f32.mxu0 0.0
        %336 = vmatmul.mubr.f32.gmra.mxu0 %v191
        %v337 = vpop.f32.mrf.mxu0
        %v338 = vadd.f32 0.0, %v337
        %v339 = vpop.f32.mrf.mxu0
        %340 = vmatprep.mubr.f32.mxu0 0.0
        %341 = vmatmul.mubr.f32.gmra.mxu0 %v192
        %v342 = vpop.f32.mrf.mxu0
        %v343 = vadd.f32 0.0, %v342
        %v344 = vpop.f32.mrf.mxu0
        %345 = vmatprep.mubr.f32.mxu0 0.0
        %346 = vmatmul.mubr.f32.gmra.mxu0 %v193
        %v347 = vpop.f32.mrf.mxu0
        %v348 = vadd.f32 0.0, %v347
        %v349 = vpop.f32.mrf.mxu0
        %350 = vmatprep.mubr.f32.mxu0 0.0
        %351 = vmatmul.mubr.f32.gmra.mxu0 %v194
        %v352 = vpop.f32.mrf.mxu0
        %v353 = vadd.f32 0.0, %v352
        %v354 = vpop.f32.mrf.mxu0
        %355 = vdwg.mxu0
        %v356 = vpack.c.bf16 %v283, %v278
        %v357 = vpack.c.bf16 %v293, %v288
        %v358 = vpack.c.bf16 %v303, %v298
        %v359 = vpack.c.bf16 %v313, %v308
        %v360 = vpack.c.bf16 %v323, %v318
        %v361 = vpack.c.bf16 %v333, %v328
        %v362 = vpack.c.bf16 %v343, %v338
        %v363 = vpack.c.bf16 %v353, %v348
        %v372 = vunpack.c.l.b16 %v356
        %v373 = vunpack.c.h.b16 %v356
        %v374 = vunpack.c.l.b16 %v357
        %v375 = vunpack.c.h.b16 %v357
        %v376 = vunpack.c.l.b16 %v358
        %v377 = vunpack.c.h.b16 %v358
        %v378 = vunpack.c.l.b16 %v359
        %v379 = vunpack.c.h.b16 %v359
        %v380 = vunpack.c.l.b16 %v360
        %v381 = vunpack.c.h.b16 %v360
        %v382 = vunpack.c.l.b16 %v361
        %v383 = vunpack.c.h.b16 %v361
        %v384 = vunpack.c.l.b16 %v362
        %v385 = vunpack.c.h.b16 %v362
        %v386 = vunpack.c.l.b16 %v363
        %v387 = vunpack.c.h.b16 %v363
        %v388 = vpack.c.b16 %v372, %v372
        %v389 = vpack.c.b16 %v373, %v373
        %v390 = vpack.c.b16 %v374, %v374
        %v391 = vpack.c.b16 %v375, %v375
        %v392 = vpack.c.b16 %v376, %v376
        %v393 = vpack.c.b16 %v377, %v377
        %v394 = vpack.c.b16 %v378, %v378
        %v395 = vpack.c.b16 %v379, %v379
        %v396 = vpack.c.b16 %v380, %v380
        %v397 = vpack.c.b16 %v381, %v381
        %v398 = vpack.c.b16 %v382, %v382
        %v399 = vpack.c.b16 %v383, %v383
        %v400 = vpack.c.b16 %v384, %v384
        %v401 = vpack.c.b16 %v385, %v385
        %v402 = vpack.c.b16 %v386, %v386
        %v403 = vpack.c.b16 %v387, %v387
        %420 = vst [vmem:[%s176] sm:$0xf] %v388
        %421 = vst [vmem:[%s176 + $0x4] sm:$0xf] %v389
        %422 = vst [vmem:[%s176 + $0x8] sm:$0xf] %v390
        %423 = vst [vmem:[%s176 + $0xc] sm:$0xf] %v391
        %424 = vst [vmem:[%s176 + $0x10] sm:$0xf] %v392
        %425 = vst [vmem:[%s176 + $0x14] sm:$0xf] %v393
        %426 = vst [vmem:[%s176 + $0x18] sm:$0xf] %v394
        %427 = vst [vmem:[%s176 + $0x1c] sm:$0xf] %v395
        %428 = vst [vmem:[%s176 + $0x20] sm:$0xf] %v396
        %429 = vst [vmem:[%s176 + $0x24] sm:$0xf] %v397
        %430 = vst [vmem:[%s176 + $0x28] sm:$0xf] %v398
        %431 = vst [vmem:[%s176 + $0x2c] sm:$0xf] %v399
        %432 = vst [vmem:[%s176 + $0x30] sm:$0xf] %v400
        %433 = vst [vmem:[%s176 + $0x34] sm:$0xf] %v401
        %434 = vst [vmem:[%s176 + $0x38] sm:$0xf] %v402
        %435 = vst [vmem:[%s176 + $0x3c] sm:$0xf] %v403
        %s436 = sand.u32 %s75, 1
        %s437 = scalar_lea.sflag [#allocation4], %s436
        %s438 = sand.u32 %s75, 1
        %s439 = smul.addr %s438, 64
        %s440 = scalar_lea.vmem [#allocation7], %s439
        // Predicated region
        $region37: #{tpu_custom_call.1} parent=27 // pred_check
          %p441 = pneg %p85
        $region38: #{tpu_custom_call.1} parent=27 // pred_check_branch
          %443 = sbr.rel (%p441) target = $region40
        $region39: #{tpu_custom_call.1} parent=27 // pred_region
          %s444 = smul.u32 16, %s20
          %s446 = ssub.s32 1024, 1024
          %447 = vsyncadd %s437, %s446
          %s448 = smul.addr %s444, 64
          %s449 = scalar_lea.hbm %s2, %s448
          %s450 = sshll.u32 %s440, 4
          %s451 = int_to_ptr.vmem [resolvable:$true] %s450
          %456 = dma.vmem_to_hbm [thread:$0]  %s451, 1024, %s449, %s437, 64, 64, 4
        $region40: #{tpu_custom_call.1} parent=27 // pred_fallthru
          _
      $region28: #{tpu_custom_call.1} parent=5 // pred_fallthru
        _
      %p457 = scmp.le.s32.totalorder 2, %s15
      // Predicated region
      $region41: #{tpu_custom_call.1} parent=5 // pred_check
        %p458 = pneg %p457
      $region42: #{tpu_custom_call.1} parent=5 // pred_check_branch
        %460 = sbr.rel (%p458) target = $region44
      $region43: #{tpu_custom_call.1} parent=5 // pred_region
        %s461 = ssub.s32 %s15, 2
        // Predicated region
        $region45: #{tpu_custom_call.1} parent=43 // pred_check
          %p462 = pneg %p91
        $region46: #{tpu_custom_call.1} parent=43 // pred_check_branch
          %464 = sbr.rel (%p462) target = $region48
        $region47: #{tpu_custom_call.1} parent=43 // pred_region
          %s465 = sand.u32 %s76, 1
          %s466 = scalar_lea.sflag [#allocation4], %s465
          %s467 = sand.u32 %s76, 1
          %s468 = smul.addr %s467, 64
          %s469 = scalar_lea.vmem [#allocation7], %s468
          %470 = dma.done %s466, 1024
        $region48: #{tpu_custom_call.1} parent=43 // pred_fallthru
          _
      $region44: #{tpu_custom_call.1} parent=5 // pred_fallthru
        _
    $region6: #{tpu_custom_call.1} parent=1 // loop_footer
      %s19 = sadd.s32 1, %s15
    $region7: #{tpu_custom_call.1} parent=1 // loop_footer_branch
      %14 = sbr.rel target = $region3
    $region8: #{tpu_custom_call.1} parent=1 // loop_exit
      _
    %471 = vsyncpa [#allocation3], 1
    %s472 = scalar_lea.sflag [#allocation3], 1
    %473 = vsyncpa %s472, 1
    %474 = vsyncpa [#allocation6], 1
    %475 = vsyncpa [#allocation4], 1
    %s476 = scalar_lea.sflag [#allocation4], 1
    %477 = vsyncpa %s476, 1

</llo_original>
